<compile_context>
chip_gen: v7x
topology: tpu7x:2x2x1
jax: 0.10.0
libtpu: 0.0.40
codegen_flags: <defaults>
</compile_context>

<pallas_src>
import functools

import jax
import jax.numpy as jnp
from jax.experimental import pallas as pl
from jax.experimental.pallas import tpu as pltpu

BN_EPS = 1e-5
_LANE = 128
_SUBLANE = 8
_VPU_MAX_CIN = 32          # unrolled broadcast-FMA path for tiny channel counts
_TILE_CAP = 65536          # max pixel columns per tile (lane-dense)
_VMEM_BUDGET = 12 * 1024 * 1024  # double-buffered working set; fits v5e's 16 MiB
                                 # default scoped VMEM (and v6e/v7x's 32 MiB)


def _round_up(a, b):
    return (a + b - 1) // b * b


def _contract(w, x, init=None):
    """(Cout, Cin) @ (Cin, THW) -> (Cout, THW) in f32, plus optional (Cout,1) init.

    For tiny Cin the contraction is unrolled as VPU broadcast-FMAs (exact f32,
    no MXU push/pop for a <1%-utilized systolic array); the optional `init`
    (BN shift) is folded into the first term so it costs no extra VPU add.
    Larger channel counts go through the MXU.
    """
    cin = x.shape[0]
    if cin <= _VPU_MAX_CIN:
        y = w[:, 0:1] * x[0:1, :]
        if init is not None:
            y = y + init
        for ci in range(1, cin):
            y = y + w[:, ci:ci + 1] * x[ci:ci + 1, :]
        return y
    y = jnp.dot(w, x, preferred_element_type=jnp.float32)
    if init is not None:
        y = y + init
    return y


def _stats_kernel(w_ref, x_ref, sum_ref, ssq_ref, *, hw, thw, mask_tail):
    """Pass 1: per-N partial per-channel sum(y) and sum(y*y), y = W @ x."""
    @pl.when(pl.program_id(1) == 0)
    def _init():
        sum_ref[...] = jnp.zeros_like(sum_ref)
        ssq_ref[...] = jnp.zeros_like(ssq_ref)

    x = x_ref[...].astype(jnp.float32)              # (Cin, thw)  lane-dense
    if mask_tail:
        # Ragged boundary block: Pallas pads the input block with unspecified
        # values; zero them so they contribute nothing to the BN sums.
        col = jax.lax.broadcasted_iota(jnp.int32, x.shape, 1) + pl.program_id(1) * thw
        x = jnp.where(col < hw, x, 0.0)
    w = w_ref[...].astype(jnp.float32)              # (Cout, Cin)
    y = _contract(w, x)                             # (Cout, thw)
    sum_ref[...] += jnp.sum(y, axis=1, keepdims=True)
    ssq_ref[...] += jnp.sum(y * y, axis=1, keepdims=True)


def _normalize_kernel(wf_ref, shift_ref, x_ref, o_ref):
    """Pass 2: out = (gamma*inv_std*W) @ x + shift (BN affine pre-folded).

    Out-of-bounds columns of the boundary block are dropped by Pallas on
    writeback, so no masking / wrapper-side slicing is needed.
    """
    x = x_ref[...].astype(jnp.float32)              # (Cin, thw)
    y = _contract(wf_ref[...], x, init=shift_ref[...])
    o_ref[...] = y.astype(o_ref.dtype)


def _pick_hw_tile(hw, cin, cout, in_itemsize, out_itemsize):
    """Largest lane-dense pixel tile whose double-buffered working set (with
    (8,128) sublane padding accounted for) stays inside every generation's
    default scoped VMEM."""
    cin_p = _round_up(max(cin, 1), _SUBLANE)
    cout_p = _round_up(max(cout, 1), _SUBLANE)
    per_col = 2 * (cin_p * in_itemsize + cout_p * out_itemsize)   # x2 = double-buffer
    thw = (_VMEM_BUDGET // per_col) // _LANE * _LANE
    thw = max(_LANE, min(_TILE_CAP, thw))
    return min(thw, _round_up(hw, _LANE))


@jax.jit
def mapping_forward(x_nchw, conv_weight, gamma, beta):
    """x_nchw: (N, Cin, H, W); conv_weight: (Cout, Cin, 1, 1); gamma/beta: (Cout,)."""
    N, Cin, H, W = x_nchw.shape
    Cout = conv_weight.shape[0]
    HW = H * W
    out_dtype = x_nchw.dtype

    thw = _pick_hw_tile(HW, Cin, Cout,
                        x_nchw.dtype.itemsize, jnp.dtype(out_dtype).itemsize)
    n_tiles = pl.cdiv(HW, thw)
    mask_tail = (HW % thw) != 0

    x3 = x_nchw.reshape(N, Cin, HW)                 # free reshape, stays NCHW
    w2d = conv_weight.reshape(Cout, Cin).astype(jnp.float32)

    # ---- pass 1: tiled per-N partial sum / sum-of-squares of y = W @ x ----
    stats_kernel = functools.partial(_stats_kernel, hw=HW, thw=thw,
                                     mask_tail=mask_tail)
    sum_n, ssq_n = pl.pallas_call(
        stats_kernel,
        out_shape=(jax.ShapeDtypeStruct((N, Cout, 1), jnp.float32),
                   jax.ShapeDtypeStruct((N, Cout, 1), jnp.float32)),
        grid_spec=pltpu.PrefetchScalarGridSpec(
            num_scalar_prefetch=0,
            grid=(N, n_tiles),
            in_specs=[
                pl.BlockSpec((Cout, Cin), lambda n, t: (0, 0)),          # weight (resident)
                pl.BlockSpec((None, Cin, thw), lambda n, t: (n, 0, t)),  # x tile
            ],
            out_specs=[
                pl.BlockSpec((None, Cout, 1), lambda n, t: (n, 0, 0)),   # per-N sum(y)
                pl.BlockSpec((None, Cout, 1), lambda n, t: (n, 0, 0)),   # per-N sum(y^2)
            ],
        ),
        compiler_params=pltpu.CompilerParams(
            dimension_semantics=("parallel", "arbitrary")),
    )(w2d, x3)

    # Tiny per-channel math in plain JAX; reduce the per-N partials and fold
    # BN into scale/shift so pass 2 is a single FMA per element.
    m = jnp.float32(N * HW)
    sum_y = jnp.sum(sum_n[:, :, 0], axis=0)                  # (Cout,)
    ssq_y = jnp.sum(ssq_n[:, :, 0], axis=0)                  # (Cout,)
    mean = sum_y / m
    var = jnp.maximum(ssq_y / m - mean * mean, 0.0)          # biased var, clamped
    inv_std = jax.lax.rsqrt(var + BN_EPS)
    scale = gamma.astype(jnp.float32) * inv_std              # (Cout,)
    shift = (beta.astype(jnp.float32) - mean * scale).reshape(Cout, 1)
    w_fold = w2d * scale[:, None]                            # (Cout, Cin)

    # ---- pass 2: out = w_fold @ x + shift, tiled & fully parallel ----
    out3 = pl.pallas_call(
        _normalize_kernel,
        out_shape=jax.ShapeDtypeStruct((N, Cout, HW), out_dtype),
        grid_spec=pltpu.PrefetchScalarGridSpec(
            num_scalar_prefetch=0,
            grid=(N, n_tiles),
            in_specs=[
                pl.BlockSpec((Cout, Cin), lambda n, t: (0, 0)),          # folded weight
                pl.BlockSpec((Cout, 1), lambda n, t: (0, 0)),            # folded shift
                pl.BlockSpec((None, Cin, thw), lambda n, t: (n, 0, t)),  # x tile
            ],
            out_specs=pl.BlockSpec((None, Cout, thw), lambda n, t: (n, 0, t)),
        ),
        compiler_params=pltpu.CompilerParams(
            dimension_semantics=("parallel", "parallel")),
    )(w_fold, shift, x3)

    return out3.reshape(N, Cout, H, W)


def mapping_reference(x_nchw, conv_weight, gamma, beta):
    """Pure-JAX reference (exact f32) for correctness checking."""
    N, Cin, H, W = x_nchw.shape
    Cout = conv_weight.shape[0]
    w2d = conv_weight.reshape(Cout, Cin)
    y = jnp.einsum("nchw,oc->nohw", x_nchw.astype(jnp.float32),
                   w2d.astype(jnp.float32),
                   precision=jax.lax.Precision.HIGHEST)
    mean = jnp.mean(y, axis=(0, 2, 3), keepdims=True)
    var = jnp.mean((y - mean) ** 2, axis=(0, 2, 3), keepdims=True)
    yhat = (y - mean) * jax.lax.rsqrt(var + BN_EPS)
    return yhat * gamma.reshape(1, Cout, 1, 1) + beta.reshape(1, Cout, 1, 1)


if __name__ == "__main__":
    key = jax.random.PRNGKey(0)
    kx, kw, kg, kb = jax.random.split(key, 4)

    N, Cin, H, W = 2, 4, 16, 16
    Cout = 8

    x = jax.random.normal(kx, (N, Cin, H, W), dtype=jnp.float32)
    # Conv2d(in, out, 1, 1, bias=False) weight: (Cout, Cin, 1, 1)
    conv_weight = jax.random.normal(kw, (Cout, Cin, 1, 1), dtype=jnp.float32) * 0.5
    # Non-trivial affine params to exercise the folded scale/shift path
    # (PyTorch __init__ values would be gamma=1, beta=0).
    gamma = 1.0 + 0.1 * jax.random.normal(kg, (Cout,), dtype=jnp.float32)
    beta = 0.1 * jax.random.normal(kb, (Cout,), dtype=jnp.float32)

    out = mapping_forward(x, conv_weight, gamma, beta)
    out = jax.block_until_ready(out)

    ref = mapping_reference(x, conv_weight, gamma, beta)
    assert out.shape == (N, Cout, H, W)
    assert jnp.allclose(out, ref, atol=1e-4, rtol=1e-4), (
        float(jnp.max(jnp.abs(out - ref))))

    print("KERNEL_OK")
</pallas_src>

<mosaic_0001>
module attributes {stable_mosaic.version = 11 : i64} {
  func.func @_stats_kernel(%arg0: i32, %arg1: i32, %arg2: memref<8x4xf32, #tpu.memory_space<vmem>>, %arg3: memref<1x4x256xf32, #tpu.memory_space<vmem>>, %arg4: memref<1x8x1xf32, #tpu.memory_space<vmem>>, %arg5: memref<1x8x1xf32, #tpu.memory_space<vmem>>) attributes {dimension_semantics = [#tpu.dimension_semantics<parallel>, #tpu.dimension_semantics<arbitrary>], iteration_bounds = array<i64: 2, 1>, scalar_prefetch = 0 : i64, scratch_operands = 0 : i64, tpu.core_type = #tpu.core_type<tc>, window_params = [{pipeline_mode = #tpu.pipeline_mode<synchronous>, transform_indices = @transform_0, window_bounds = array<i64: 8, 4>}, {transform_indices = @transform_1, window_bounds = array<i64: 1, 4, 256>}, {transform_indices = @transform_2, window_bounds = array<i64: 1, 8, 1>}, {transform_indices = @transform_3, window_bounds = array<i64: 1, 8, 1>}]} {
    %c0_i32 = arith.constant 0 : i32
    %0 = arith.cmpi eq, %arg1, %c0_i32 : i32
    %1 = arith.extui %0 : i1 to i32
    %c0_i32_0 = arith.constant 0 : i32
    %2 = arith.cmpi ne, %1, %c0_i32_0 : i32
    scf.if %2 {
      %cst_18 = arith.constant 0.000000e+00 : f32
      %46 = vector.broadcast %cst_18 : f32 to vector<8x1xf32>
      %c0_19 = arith.constant 0 : index
      %c0_20 = arith.constant 0 : index
      %c0_21 = arith.constant 0 : index
      %47 = vector.load %arg4[%c0_19, %c0_20, %c0_21] : memref<1x8x1xf32, #tpu.memory_space<vmem>>, vector<1x8x1xf32>
      %48 = vector.shape_cast %47 : vector<1x8x1xf32> to vector<8x1xf32>
      %49 = vector.shape_cast %46 : vector<8x1xf32> to vector<1x8x1xf32>
      tpu.vector_store %arg4[%c0_19, %c0_20, %c0_21], %49 {strides = array<i32>} : memref<1x8x1xf32, #tpu.memory_space<vmem>>, vector<1x8x1xf32>,
      %cst_22 = arith.constant 0.000000e+00 : f32
      %50 = vector.broadcast %cst_22 : f32 to vector<8x1xf32>
      %c0_23 = arith.constant 0 : index
      %c0_24 = arith.constant 0 : index
      %c0_25 = arith.constant 0 : index
      %51 = vector.load %arg5[%c0_23, %c0_24, %c0_25] : memref<1x8x1xf32, #tpu.memory_space<vmem>>, vector<1x8x1xf32>
      %52 = vector.shape_cast %51 : vector<1x8x1xf32> to vector<8x1xf32>
      %53 = vector.shape_cast %50 : vector<8x1xf32> to vector<1x8x1xf32>
      tpu.vector_store %arg5[%c0_23, %c0_24, %c0_25], %53 {strides = array<i32>} : memref<1x8x1xf32, #tpu.memory_space<vmem>>, vector<1x8x1xf32>,
    } else {
    }
    %c0 = arith.constant 0 : index
    %c0_1 = arith.constant 0 : index
    %c0_2 = arith.constant 0 : index
    %3 = vector.load %arg3[%c0, %c0_1, %c0_2] : memref<1x4x256xf32, #tpu.memory_space<vmem>>, vector<1x4x256xf32>
    %4 = vector.shape_cast %3 : vector<1x4x256xf32> to vector<4x256xf32>
    %c0_3 = arith.constant 0 : index
    %c0_4 = arith.constant 0 : index
    %5 = vector.load %arg2[%c0_3, %c0_4] : memref<8x4xf32, #tpu.memory_space<vmem>>, vector<8x4xf32>
    %6 = vector.extract_strided_slice %5 {offsets = [0, 0], sizes = [8, 1], strides = [1, 1]} : vector<8x4xf32> to vector<8x1xf32>
    %7 = vector.extract_strided_slice %4 {offsets = [0, 0], sizes = [1, 256], strides = [1, 1]} : vector<4x256xf32> to vector<1x256xf32>
    %8 = vector.broadcast %6 : vector<8x1xf32> to vector<8x256xf32>
    %9 = vector.broadcast %7 : vector<1x256xf32> to vector<8x256xf32>
    %10 = arith.mulf %8, %9 : vector<8x256xf32>
    %11 = vector.extract_strided_slice %5 {offsets = [0, 1], sizes = [8, 1], strides = [1, 1]} : vector<8x4xf32> to vector<8x1xf32>
    %12 = vector.extract_strided_slice %4 {offsets = [1, 0], sizes = [1, 256], strides = [1, 1]} : vector<4x256xf32> to vector<1x256xf32>
    %13 = vector.broadcast %11 : vector<8x1xf32> to vector<8x256xf32>
    %14 = vector.broadcast %12 : vector<1x256xf32> to vector<8x256xf32>
    %15 = arith.mulf %13, %14 : vector<8x256xf32>
    %16 = arith.addf %10, %15 : vector<8x256xf32>
    %17 = vector.extract_strided_slice %5 {offsets = [0, 2], sizes = [8, 1], strides = [1, 1]} : vector<8x4xf32> to vector<8x1xf32>
    %18 = vector.extract_strided_slice %4 {offsets = [2, 0], sizes = [1, 256], strides = [1, 1]} : vector<4x256xf32> to vector<1x256xf32>
    %19 = vector.broadcast %17 : vector<8x1xf32> to vector<8x256xf32>
    %20 = vector.broadcast %18 : vector<1x256xf32> to vector<8x256xf32>
    %21 = arith.mulf %19, %20 : vector<8x256xf32>
    %22 = arith.addf %16, %21 : vector<8x256xf32>
    %23 = vector.extract_strided_slice %5 {offsets = [0, 3], sizes = [8, 1], strides = [1, 1]} : vector<8x4xf32> to vector<8x1xf32>
    %24 = vector.extract_strided_slice %4 {offsets = [3, 0], sizes = [1, 256], strides = [1, 1]} : vector<4x256xf32> to vector<1x256xf32>
    %25 = vector.broadcast %23 : vector<8x1xf32> to vector<8x256xf32>
    %26 = vector.broadcast %24 : vector<1x256xf32> to vector<8x256xf32>
    %27 = arith.mulf %25, %26 : vector<8x256xf32>
    %28 = arith.addf %22, %27 : vector<8x256xf32>
    %c0_5 = arith.constant 0 : index
    %c0_6 = arith.constant 0 : index
    %c0_7 = arith.constant 0 : index
    %29 = vector.load %arg4[%c0_5, %c0_6, %c0_7] : memref<1x8x1xf32, #tpu.memory_space<vmem>>, vector<1x8x1xf32>
    %30 = vector.shape_cast %29 : vector<1x8x1xf32> to vector<8x1xf32>
    %cst = arith.constant dense<0.000000e+00> : vector<8xf32>
    %31 = vector.multi_reduction <add>, %28, %cst [1] : vector<8x256xf32> to vector<8xf32>
    %32 = vector.shape_cast %31 : vector<8xf32> to vector<8x1xf32>
    %33 = arith.addf %30, %32 : vector<8x1xf32>
    %c0_8 = arith.constant 0 : index
    %c0_9 = arith.constant 0 : index
    %c0_10 = arith.constant 0 : index
    %34 = vector.load %arg4[%c0_8, %c0_9, %c0_10] : memref<1x8x1xf32, #tpu.memory_space<vmem>>, vector<1x8x1xf32>
    %35 = vector.shape_cast %34 : vector<1x8x1xf32> to vector<8x1xf32>
    %36 = vector.shape_cast %33 : vector<8x1xf32> to vector<1x8x1xf32>
    tpu.vector_store %arg4[%c0_8, %c0_9, %c0_10], %36 {strides = array<i32>} : memref<1x8x1xf32, #tpu.memory_space<vmem>>, vector<1x8x1xf32>,
    %c0_11 = arith.constant 0 : index
    %c0_12 = arith.constant 0 : index
    %c0_13 = arith.constant 0 : index
    %37 = vector.load %arg5[%c0_11, %c0_12, %c0_13] : memref<1x8x1xf32, #tpu.memory_space<vmem>>, vector<1x8x1xf32>
    %38 = vector.shape_cast %37 : vector<1x8x1xf32> to vector<8x1xf32>
    %39 = arith.mulf %28, %28 : vector<8x256xf32>
    %cst_14 = arith.constant dense<0.000000e+00> : vector<8xf32>
    %40 = vector.multi_reduction <add>, %39, %cst_14 [1] : vector<8x256xf32> to vector<8xf32>
    %41 = vector.shape_cast %40 : vector<8xf32> to vector<8x1xf32>
    %42 = arith.addf %38, %41 : vector<8x1xf32>
    %c0_15 = arith.constant 0 : index
    %c0_16 = arith.constant 0 : index
    %c0_17 = arith.constant 0 : index
    %43 = vector.load %arg5[%c0_15, %c0_16, %c0_17] : memref<1x8x1xf32, #tpu.memory_space<vmem>>, vector<1x8x1xf32>
    %44 = vector.shape_cast %43 : vector<1x8x1xf32> to vector<8x1xf32>
    %45 = vector.shape_cast %42 : vector<8x1xf32> to vector<1x8x1xf32>
    tpu.vector_store %arg5[%c0_15, %c0_16, %c0_17], %45 {strides = array<i32>} : memref<1x8x1xf32, #tpu.memory_space<vmem>>, vector<1x8x1xf32>,
    return
  }
  func.func @transform_0(%arg0: i32, %arg1: i32) -> (i32, i32) {
    %c0_i32 = arith.constant 0 : i32
    %c0_i32_0 = arith.constant 0 : i32
    %c0_i32_1 = arith.constant 0 : i32
    return %c0_i32, %c0_i32_0 : i32, i32
  }
  func.func @transform_1(%arg0: i32, %arg1: i32) -> (i32, i32, i32) {
    %c0_i32 = arith.constant 0 : i32
    %c0_i32_0 = arith.constant 0 : i32
    return %arg0, %c0_i32, %arg1 : i32, i32, i32
  }
  func.func @transform_2(%arg0: i32, %arg1: i32) -> (i32, i32, i32) {
    %c0_i32 = arith.constant 0 : i32
    %c0_i32_0 = arith.constant 0 : i32
    %c0_i32_1 = arith.constant 0 : i32
    return %arg0, %c0_i32, %c0_i32_0 : i32, i32, i32
  }
  func.func @transform_3(%arg0: i32, %arg1: i32) -> (i32, i32, i32) {
    %c0_i32 = arith.constant 0 : i32
    %c0_i32_0 = arith.constant 0 : i32
    %c0_i32_1 = arith.constant 0 : i32
    return %arg0, %c0_i32, %c0_i32_0 : i32, i32, i32
  }
}

module attributes {stable_mosaic.version = 11 : i64} {
  func.func @_normalize_kernel(%arg0: i32, %arg1: i32, %arg2: memref<8x4xf32, #tpu.memory_space<vmem>>, %arg3: memref<8x1xf32, #tpu.memory_space<vmem>>, %arg4: memref<1x4x256xf32, #tpu.memory_space<vmem>>, %arg5: memref<1x8x256xf32, #tpu.memory_space<vmem>>) attributes {dimension_semantics = [#tpu.dimension_semantics<parallel>, #tpu.dimension_semantics<parallel>], iteration_bounds = array<i64: 2, 1>, scalar_prefetch = 0 : i64, scratch_operands = 0 : i64, tpu.core_type = #tpu.core_type<tc>, window_params = [{pipeline_mode = #tpu.pipeline_mode<synchronous>, transform_indices = @transform_0, window_bounds = array<i64: 8, 4>}, {pipeline_mode = #tpu.pipeline_mode<synchronous>, transform_indices = @transform_1, window_bounds = array<i64: 8, 1>}, {transform_indices = @transform_2, window_bounds = array<i64: 1, 4, 256>}, {transform_indices = @transform_3, window_bounds = array<i64: 1, 8, 256>}]} {
    %c0 = arith.constant 0 : index
    %c0_0 = arith.constant 0 : index
    %c0_1 = arith.constant 0 : index
    %0 = vector.load %arg4[%c0, %c0_0, %c0_1] : memref<1x4x256xf32, #tpu.memory_space<vmem>>, vector<1x4x256xf32>
    %1 = vector.shape_cast %0 : vector<1x4x256xf32> to vector<4x256xf32>
    %c0_2 = arith.constant 0 : index
    %c0_3 = arith.constant 0 : index
    %2 = vector.load %arg2[%c0_2, %c0_3] : memref<8x4xf32, #tpu.memory_space<vmem>>, vector<8x4xf32>
    %c0_4 = arith.constant 0 : index
    %c0_5 = arith.constant 0 : index
    %3 = vector.load %arg3[%c0_4, %c0_5] : memref<8x1xf32, #tpu.memory_space<vmem>>, vector<8x1xf32>
    %4 = vector.extract_strided_slice %2 {offsets = [0, 0], sizes = [8, 1], strides = [1, 1]} : vector<8x4xf32> to vector<8x1xf32>
    %5 = vector.extract_strided_slice %1 {offsets = [0, 0], sizes = [1, 256], strides = [1, 1]} : vector<4x256xf32> to vector<1x256xf32>
    %6 = vector.broadcast %4 : vector<8x1xf32> to vector<8x256xf32>
    %7 = vector.broadcast %5 : vector<1x256xf32> to vector<8x256xf32>
    %8 = arith.mulf %6, %7 : vector<8x256xf32>
    %9 = vector.broadcast %3 : vector<8x1xf32> to vector<8x256xf32>
    %10 = arith.addf %8, %9 : vector<8x256xf32>
    %11 = vector.extract_strided_slice %2 {offsets = [0, 1], sizes = [8, 1], strides = [1, 1]} : vector<8x4xf32> to vector<8x1xf32>
    %12 = vector.extract_strided_slice %1 {offsets = [1, 0], sizes = [1, 256], strides = [1, 1]} : vector<4x256xf32> to vector<1x256xf32>
    %13 = vector.broadcast %11 : vector<8x1xf32> to vector<8x256xf32>
    %14 = vector.broadcast %12 : vector<1x256xf32> to vector<8x256xf32>
    %15 = arith.mulf %13, %14 : vector<8x256xf32>
    %16 = arith.addf %10, %15 : vector<8x256xf32>
    %17 = vector.extract_strided_slice %2 {offsets = [0, 2], sizes = [8, 1], strides = [1, 1]} : vector<8x4xf32> to vector<8x1xf32>
    %18 = vector.extract_strided_slice %1 {offsets = [2, 0], sizes = [1, 256], strides = [1, 1]} : vector<4x256xf32> to vector<1x256xf32>
    %19 = vector.broadcast %17 : vector<8x1xf32> to vector<8x256xf32>
    %20 = vector.broadcast %18 : vector<1x256xf32> to vector<8x256xf32>
    %21 = arith.mulf %19, %20 : vector<8x256xf32>
    %22 = arith.addf %16, %21 : vector<8x256xf32>
    %23 = vector.extract_strided_slice %2 {offsets = [0, 3], sizes = [8, 1], strides = [1, 1]} : vector<8x4xf32> to vector<8x1xf32>
    %24 = vector.extract_strided_slice %1 {offsets = [3, 0], sizes = [1, 256], strides = [1, 1]} : vector<4x256xf32> to vector<1x256xf32>
    %25 = vector.broadcast %23 : vector<8x1xf32> to vector<8x256xf32>
    %26 = vector.broadcast %24 : vector<1x256xf32> to vector<8x256xf32>
    %27 = arith.mulf %25, %26 : vector<8x256xf32>
    %28 = arith.addf %22, %27 : vector<8x256xf32>
    %c0_6 = arith.constant 0 : index
    %c0_7 = arith.constant 0 : index
    %c0_8 = arith.constant 0 : index
    %29 = vector.load %arg5[%c0_6, %c0_7, %c0_8] : memref<1x8x256xf32, #tpu.memory_space<vmem>>, vector<1x8x256xf32>
    %30 = vector.shape_cast %29 : vector<1x8x256xf32> to vector<8x256xf32>
    %31 = vector.shape_cast %28 : vector<8x256xf32> to vector<1x8x256xf32>
    tpu.vector_store %arg5[%c0_6, %c0_7, %c0_8], %31 {strides = array<i32>} : memref<1x8x256xf32, #tpu.memory_space<vmem>>, vector<1x8x256xf32>,
    return
  }
  func.func @transform_0(%arg0: i32, %arg1: i32) -> (i32, i32) {
    %c0_i32 = arith.constant 0 : i32
    %c0_i32_0 = arith.constant 0 : i32
    %c0_i32_1 = arith.constant 0 : i32
    return %c0_i32, %c0_i32_0 : i32, i32
  }
  func.func @transform_1(%arg0: i32, %arg1: i32) -> (i32, i32) {
    %c0_i32 = arith.constant 0 : i32
    %c0_i32_0 = arith.constant 0 : i32
    %c0_i32_1 = arith.constant 0 : i32
    return %c0_i32, %c0_i32_0 : i32, i32
  }
  func.func @transform_2(%arg0: i32, %arg1: i32) -> (i32, i32, i32) {
    %c0_i32 = arith.constant 0 : i32
    %c0_i32_0 = arith.constant 0 : i32
    return %arg0, %c0_i32, %arg1 : i32, i32, i32
  }
  func.func @transform_3(%arg0: i32, %arg1: i32) -> (i32, i32, i32) {
    %c0_i32 = arith.constant 0 : i32
    %c0_i32_0 = arith.constant 0 : i32
    return %arg0, %c0_i32, %arg1 : i32, i32, i32
  }
}

</mosaic_0001>

<llo_original>
// kernel: mapping_forward.3
$region0: #{mapping_forward.3}
  #allocation0 [shape = 'u32[]', space=smem, size = 0x4, offset = 0x4, fixed_abs, tag = 'smem constant byte address 0x4 - core index']
  #allocation1 [shape = 'u32[144,128]{1,0:T(1,128)}', space=vmem, size = 0x12000, scoped, tag = 'internal scratch']
  %s0 = inlined_call_operand.vmem [shape: f32[8,4], index: 0, kind: input, shape index: {}]
  %s1 = inlined_call_operand.vmem [shape: f32[8,1], index: 1, kind: input, shape index: {}]
  %s2 = inlined_call_operand.vmem [shape: f32[2,4,256], index: 2, kind: input, shape index: {}]
  %s3 = inlined_call_operand.vmem [shape: f32[2,8,256], index: 3, kind: output, shape index: {}]
  %s4 = sld [smem:[#allocation0]]
  $region45: #{mapping_forward.3} parent=0
    _
  %s6 = ssub.s32 1, %s4
  %s7 = scalar_select 0, %s6, %s4
  loop: start=0, step=1, limit=4
  $region2: #{mapping_forward.3} parent=0 // loop_pre_header
    _
  $region3: #{mapping_forward.3} parent=0 // loop_header
    %s9 = sphi 0, %s13
    %p10 = scmp.ge.s32.totalorder %s9, 4
    %s16 = sphi 0, %s28
    %s17 = sphi 0, %s24
    %s18 = sphi 0, %s16
    %s19 = sphi 0, %s17
    %s20 = sphi 0, %s18
    %s21 = sphi 0, %s19
    %s29 = sphi 0, %s29
    %s31 = sphi 0, %s29
    %s32 = sphi 0, %s31
    %s46 = sphi 0, %s32
    %s50 = sphi 0, %s50
    %s52 = sphi 0, %s50
    %s53 = sphi 0, %s52
    %s67 = sphi 0, %s53
    %s75 = sphi 0, %s77
    %s78 = sphi 0, %s75
    %s79 = sphi 0, %s78
    %s95 = sphi 0, %s79
    %s103 = sphi 0, %s105
    %s106 = sphi 0, %s103
    %s107 = sphi 0, %s106
    %s123 = sphi 0, %s107
  $region4: #{mapping_forward.3} parent=0 // loop_header_branch
    %12 = sbr.rel (%p10) target = $region8
  $region5: #{mapping_forward.3} parent=0 // loop_body
    %s14 = ssub.s32 %s9, 1
    %s15 = ssub.s32 %s9, 2
    %s22 = sadd.s32 1, %s17
    %p23 = scmp.ge.s32.totalorder %s22, 1
    %s24 = scalar_select %p23, 0, %s22
    %s25 = sadd.s32 1, %s16
    %s26 = scalar_select %p23, %s25, %s16
    %p27 = scmp.ge.s32.totalorder %s26, 2
    %s28 = scalar_select %p27, 0, %s26
    %s30 = sadd.s32 %s29, 1
    %p33 = scmp.eq.s32.totalorder %s9, 1
    %p34 = scmp.ne.s32.totalorder %s29, %s31
    %p35 = scmp.eq.s32.totalorder %s9, 0
    %p36 = por %p34, %p35
    %p37 = scmp.ne.s32.totalorder %s29, %s31
    %p38 = scmp.eq.s32.totalorder %s14, 1
    %p39 = por %p37, %p38
    %p40 = scmp.ne.s32.totalorder %s31, %s32
    %p41 = scmp.eq.s32.totalorder %s14, 0
    %p42 = por %p40, %p41
    %p43 = scmp.ne.s32.totalorder %s31, %s32
    %p44 = scmp.eq.s32.totalorder %s15, 1
    %p45 = por %p43, %p44
    %p47 = scmp.ne.s32.totalorder %s32, %s46
    %p48 = scmp.eq.s32.totalorder %s15, 0
    %p49 = por %p47, %p48
    %s51 = sadd.s32 %s50, 1
    %p54 = scmp.eq.s32.totalorder %s9, 1
    %p55 = scmp.ne.s32.totalorder %s50, %s52
    %p56 = scmp.eq.s32.totalorder %s9, 0
    %p57 = por %p55, %p56
    %p58 = scmp.ne.s32.totalorder %s50, %s52
    %p59 = scmp.eq.s32.totalorder %s14, 1
    %p60 = por %p58, %p59
    %p61 = scmp.ne.s32.totalorder %s52, %s53
    %p62 = scmp.eq.s32.totalorder %s14, 0
    %p63 = por %p61, %p62
    %p64 = scmp.ne.s32.totalorder %s52, %s53
    %p65 = scmp.eq.s32.totalorder %s15, 1
    %p66 = por %p64, %p65
    %p68 = scmp.ne.s32.totalorder %s53, %s67
    %p69 = scmp.eq.s32.totalorder %s15, 0
    %p70 = por %p68, %p69
    %s71 = ssub.s32 %s16, %s28
    %s72 = ssub.s32 %s17, %s24
    %s73 = sor.u32 %s71, %s72
    %p74 = scmp.eq.s32.totalorder %s73, 0
    %s76 = sadd.s32 %s75, 1
    %s77 = scalar_select %p74, %s75, %s76
    %p80 = pneg %p74
    %p81 = scmp.eq.s32.totalorder %s9, 1
    %p82 = por %p80, %p81
    %p83 = scmp.ne.s32.totalorder %s75, %s78
    %p84 = scmp.eq.s32.totalorder %s9, 0
    %p85 = por %p83, %p84
    %p86 = scmp.ne.s32.totalorder %s75, %s78
    %p87 = scmp.eq.s32.totalorder %s14, 1
    %p88 = por %p86, %p87
    %p89 = scmp.ne.s32.totalorder %s78, %s79
    %p90 = scmp.eq.s32.totalorder %s14, 0
    %p91 = por %p89, %p90
    %p92 = scmp.ne.s32.totalorder %s78, %s79
    %p93 = scmp.eq.s32.totalorder %s15, 1
    %p94 = por %p92, %p93
    %p96 = scmp.ne.s32.totalorder %s79, %s95
    %p97 = scmp.eq.s32.totalorder %s15, 0
    %p98 = por %p96, %p97
    %s99 = ssub.s32 %s16, %s28
    %s100 = ssub.s32 %s17, %s24
    %s101 = sor.u32 %s99, %s100
    %p102 = scmp.eq.s32.totalorder %s101, 0
    %s104 = sadd.s32 %s103, 1
    %s105 = scalar_select %p102, %s103, %s104
    %p108 = pneg %p102
    %p109 = scmp.eq.s32.totalorder %s9, 1
    %p110 = por %p108, %p109
    %p111 = scmp.ne.s32.totalorder %s103, %s106
    %p112 = scmp.eq.s32.totalorder %s9, 0
    %p113 = por %p111, %p112
    %p114 = scmp.ne.s32.totalorder %s103, %s106
    %p115 = scmp.eq.s32.totalorder %s14, 1
    %p116 = por %p114, %p115
    %p117 = scmp.ne.s32.totalorder %s106, %s107
    %p118 = scmp.eq.s32.totalorder %s14, 0
    %p119 = por %p117, %p118
    %p120 = scmp.ne.s32.totalorder %s106, %s107
    %p121 = scmp.eq.s32.totalorder %s15, 1
    %p122 = por %p120, %p121
    %p124 = scmp.ne.s32.totalorder %s107, %s123
    %p125 = scmp.eq.s32.totalorder %s15, 0
    %p126 = por %p124, %p125
    %p127 = scmp.le.s32.totalorder 1, %s9
    %p128 = scmp.lt.s32.totalorder %s9, 3
    %p129 = pnand %p127, %p128
    %p130 = pneg %p129
    // Predicated region
    $region9: #{mapping_forward.3} parent=5 // pred_check
      _
    $region10: #{mapping_forward.3} parent=5 // pred_check_branch
      %132 = sbr.rel (%p129) target = $region12
    $region11: #{mapping_forward.3} parent=5 // pred_region
      %s133 = ssub.s32 %s9, 1
      // Predicated region
      $region13: #{mapping_forward.3} parent=11 // pred_check
        %p134 = pneg %p42
      $region14: #{mapping_forward.3} parent=11 // pred_check_branch
        %136 = sbr.rel (%p134) target = $region16
      $region15: #{mapping_forward.3} parent=11 // pred_region
        _
      $region16: #{mapping_forward.3} parent=11 // pred_fallthru
        _
      // Predicated region
      $region17: #{mapping_forward.3} parent=11 // pred_check
        %p137 = pneg %p63
      $region18: #{mapping_forward.3} parent=11 // pred_check_branch
        %139 = sbr.rel (%p137) target = $region20
      $region19: #{mapping_forward.3} parent=11 // pred_region
        _
      $region20: #{mapping_forward.3} parent=11 // pred_fallthru
        _
    $region12: #{mapping_forward.3} parent=5 // pred_fallthru
      _
    %p140 = scmp.lt.s32.totalorder %s9, 2
    // Predicated region
    $region21: #{mapping_forward.3} parent=5 // pred_check
      %p141 = pneg %p140
    $region22: #{mapping_forward.3} parent=5 // pred_check_branch
      %143 = sbr.rel (%p141) target = $region24
    $region23: #{mapping_forward.3} parent=5 // pred_region
      // Predicated region
      $region25: #{mapping_forward.3} parent=23 // pred_check
        %p144 = pneg %p85
      $region26: #{mapping_forward.3} parent=23 // pred_check_branch
        %146 = sbr.rel (%p144) target = $region28
      $region27: #{mapping_forward.3} parent=23 // pred_region
        %s147 = smul.u32 2, %s17
        %p148 = scmp.lt.s32.totalorder %s16, 1
        %s149 = scalar_select %p148, %s16, 1
        %p150 = scmp.lt.s32.totalorder %s147, 1
        %s151 = scalar_select %p150, %s147, 1
        %s152 = smul.addr %s149, 2
        %s153 = sadd.s32 %s151, %s152
        %s154 = smul.addr %s153, 4
        %s155 = scalar_lea.vmem %s2, %s154
        %s156 = smul.u32 2, %s17
      $region28: #{mapping_forward.3} parent=23 // pred_fallthru
        _
    $region24: #{mapping_forward.3} parent=5 // pred_fallthru
      _
    %p157 = scmp.le.s32.totalorder 1, %s9
    %p158 = scmp.lt.s32.totalorder %s9, 3
    %p159 = pnand %p157, %p158
    %p160 = pneg %p159
    // Predicated region
    $region29: #{mapping_forward.3} parent=5 // pred_check
      _
    $region30: #{mapping_forward.3} parent=5 // pred_check_branch
      %162 = sbr.rel (%p159) target = $region32
    $region31: #{mapping_forward.3} parent=5 // pred_region
      %s163 = ssub.s32 %s9, 1
      %p164 = pneg %p42
      %p165 = pneg %p39
      %p166 = pneg %p63
      %p167 = pneg %p60
      %s168 = smul.u32 2, %s19
      %p169 = scmp.lt.s32.totalorder %s18, 1
      %s170 = scalar_select %p169, %s18, 1
      %p171 = scmp.lt.s32.totalorder %s168, 1
      %s172 = scalar_select %p171, %s168, 1
      %s173 = smul.addr %s170, 2
      %s174 = sadd.s32 %s172, %s173
      %s175 = smul.addr %s174, 4
      %s176 = scalar_lea.vmem %s2, %s175
      %p177 = pneg %p91
      %p178 = pneg %p88
      %p179 = pneg %p119
      %p180 = pneg %p116
      %s181 = smul.u32 2, %s19
      %p182 = scmp.lt.s32.totalorder %s18, 1
      %s183 = scalar_select %p182, %s18, 1
      %p184 = scmp.lt.s32.totalorder %s181, 1
      %s185 = scalar_select %p184, %s181, 1
      %s186 = smul.addr %s183, 2
      %s187 = sadd.s32 %s185, %s186
      %s188 = smul.addr %s187, 8
      %s189 = scalar_lea.vmem %s3, %s188
      %s190 = smul.u32 2, %s19
      %p191 = scmp.lt.s32.totalorder %s18, 1
      %s192 = scalar_select %p191, %s18, 1
      %p193 = scmp.lt.s32.totalorder %s190, 1
      %s194 = scalar_select %p193, %s190, 1
      %s195 = smul.addr %s192, 2
      %s196 = sadd.s32 %s194, %s195
      %s197 = smul.addr %s196, 4
      %s198 = scalar_lea.vmem %s2, %s197
      %s199 = smul.u32 2, %s19
      %s200 = smul.u32 2, %s19
      %p201 = scmp.lt.s32.totalorder %s18, 1
      %s202 = scalar_select %p201, %s18, 1
      %p203 = scmp.lt.s32.totalorder %s200, 1
      %s204 = scalar_select %p203, %s200, 1
      %s205 = smul.addr %s202, 2
      %s206 = sadd.s32 %s204, %s205
      %s207 = smul.addr %s206, 8
      %s208 = scalar_lea.vmem %s3, %s207
      %s209 = smul.u32 2, %s19
      %v210 = vld [vmem:[%s198] sm:$0xff]
      %v211 = vld [vmem:[%s0] sm:$0xff]
      %v212 = vld [vmem:[%s1] sm:$0xff]
      %214 = vset.pattern.permute.xlu0 0
      %215 = vperm.xlu0 %214, %v211
      %v216 = vpop.permute.xlu0 %215
      %v219 = vlaneseq
      %v220 = vshrl.u32 %v219, 7
      %v221 = vsub.s32 0, %v220
      %v222 = vrot.slane %v210, %v221
      %v223 = vlaneseq
      %v224 = vshrl.u32 %v223, 7
      %v225 = vsub.s32 4, %v224
      %v226 = vrot.slane %v210, %v225
      %v229 = vlaneseq
      %v230 = vshrl.u32 %v229, 7
      %v231 = vsub.s32 0, %v230
      %v232 = vrot.slane %v222, %v231
      %v233 = vlaneseq
      %v234 = vshrl.u32 %v233, 7
      %v235 = vsub.s32 0, %v234
      %v236 = vrot.slane %v226, %v235
      %v237 = vmul.f32 %v216, %v232
      %v238 = vmul.f32 %v216, %v236
      %240 = vset.pattern.permute.xlu0 0
      %241 = vperm.xlu0 %240, %v212
      %v242 = vpop.permute.xlu0 %241
      %v244 = vadd.f32 %v237, %v242
      %v245 = vadd.f32 %v238, %v242
      %246 = vset.pattern.permute.xlu0 1
      %247 = vperm.xlu0 %246, %v211
      %v248 = vpop.permute.xlu0 %247
      %v250 = vlaneseq
      %v251 = vshrl.u32 %v250, 7
      %v252 = vsub.s32 1, %v251
      %v253 = vrot.slane %v210, %v252
      %v254 = vlaneseq
      %v255 = vshrl.u32 %v254, 7
      %v256 = vsub.s32 5, %v255
      %v257 = vrot.slane %v210, %v256
      %v260 = vlaneseq
      %v261 = vshrl.u32 %v260, 7
      %v262 = vsub.s32 1, %v261
      %v263 = vrot.slane %v253, %v262
      %v264 = vlaneseq
      %v265 = vshrl.u32 %v264, 7
      %v266 = vsub.s32 1, %v265
      %v267 = vrot.slane %v257, %v266
      %v268 = vmul.f32 %v248, %v263
      %v269 = vmul.f32 %v248, %v267
      %v270 = vadd.f32 %v244, %v268
      %v271 = vadd.f32 %v245, %v269
      %272 = vset.pattern.permute.xlu0 2
      %273 = vperm.xlu0 %272, %v211
      %v274 = vpop.permute.xlu0 %273
      %v276 = vlaneseq
      %v277 = vshrl.u32 %v276, 7
      %v278 = vsub.s32 2, %v277
      %v279 = vrot.slane %v210, %v278
      %v280 = vlaneseq
      %v281 = vshrl.u32 %v280, 7
      %v282 = vsub.s32 6, %v281
      %v283 = vrot.slane %v210, %v282
      %v286 = vlaneseq
      %v287 = vshrl.u32 %v286, 7
      %v288 = vsub.s32 2, %v287
      %v289 = vrot.slane %v279, %v288
      %v290 = vlaneseq
      %v291 = vshrl.u32 %v290, 7
      %v292 = vsub.s32 2, %v291
      %v293 = vrot.slane %v283, %v292
      %v294 = vmul.f32 %v274, %v289
      %v295 = vmul.f32 %v274, %v293
      %v296 = vadd.f32 %v270, %v294
      %v297 = vadd.f32 %v271, %v295
      %298 = vset.pattern.permute.xlu0 3
      %299 = vperm.xlu0 %298, %v211
      %v300 = vpop.permute.xlu0 %299
      %v302 = vlaneseq
      %v303 = vshrl.u32 %v302, 7
      %v304 = vsub.s32 3, %v303
      %v305 = vrot.slane %v210, %v304
      %v306 = vlaneseq
      %v307 = vshrl.u32 %v306, 7
      %v308 = vsub.s32 7, %v307
      %v309 = vrot.slane %v210, %v308
      %v312 = vlaneseq
      %v313 = vshrl.u32 %v312, 7
      %v314 = vsub.s32 3, %v313
      %v315 = vrot.slane %v305, %v314
      %v316 = vlaneseq
      %v317 = vshrl.u32 %v316, 7
      %v318 = vsub.s32 3, %v317
      %v319 = vrot.slane %v309, %v318
      %v320 = vmul.f32 %v300, %v315
      %v321 = vmul.f32 %v300, %v319
      %v322 = vadd.f32 %v296, %v320
      %v323 = vadd.f32 %v297, %v321
      %324 = vst [vmem:[%s208] sm:$0xff] %v322
      %325 = vst [vmem:[%s208 + $0x8] sm:$0xff] %v323
      %s326 = smul.u32 2, %s19
      %p327 = scmp.lt.s32.totalorder %s18, 1
      %s328 = scalar_select %p327, %s18, 1
      %p329 = scmp.lt.s32.totalorder %s326, 1
      %s330 = scalar_select %p329, %s326, 1
      %s331 = smul.addr %s328, 2
      %s332 = sadd.s32 %s330, %s331
      %s333 = smul.addr %s332, 8
      %s334 = scalar_lea.vmem %s3, %s333
      // Predicated region
      $region33: #{mapping_forward.3} parent=31 // pred_check
        %p335 = pneg %p116
      $region34: #{mapping_forward.3} parent=31 // pred_check_branch
        %337 = sbr.rel (%p335) target = $region36
      $region35: #{mapping_forward.3} parent=31 // pred_region
        %s338 = smul.u32 2, %s19
      $region36: #{mapping_forward.3} parent=31 // pred_fallthru
        _
    $region32: #{mapping_forward.3} parent=5 // pred_fallthru
      _
    %p339 = scmp.le.s32.totalorder 2, %s9
    // Predicated region
    $region37: #{mapping_forward.3} parent=5 // pred_check
      %p340 = pneg %p339
    $region38: #{mapping_forward.3} parent=5 // pred_check_branch
      %342 = sbr.rel (%p340) target = $region40
    $region39: #{mapping_forward.3} parent=5 // pred_region
      %s343 = ssub.s32 %s9, 2
      // Predicated region
      $region41: #{mapping_forward.3} parent=39 // pred_check
        %p344 = pneg %p122
      $region42: #{mapping_forward.3} parent=39 // pred_check_branch
        %346 = sbr.rel (%p344) target = $region44
      $region43: #{mapping_forward.3} parent=39 // pred_region
        %s347 = smul.u32 2, %s21
        %p348 = scmp.lt.s32.totalorder %s20, 1
        %s349 = scalar_select %p348, %s20, 1
        %p350 = scmp.lt.s32.totalorder %s347, 1
        %s351 = scalar_select %p350, %s347, 1
        %s352 = smul.addr %s349, 2
        %s353 = sadd.s32 %s351, %s352
        %s354 = smul.addr %s353, 8
        %s355 = scalar_lea.vmem %s3, %s354
      $region44: #{mapping_forward.3} parent=39 // pred_fallthru
        _
    $region40: #{mapping_forward.3} parent=5 // pred_fallthru
      _
  $region6: #{mapping_forward.3} parent=0 // loop_footer
    %s13 = sadd.s32 1, %s9
  $region7: #{mapping_forward.3} parent=0 // loop_footer_branch
    %8 = sbr.rel target = $region3
  $region8: #{mapping_forward.3} parent=0 // loop_exit
    _

// kernel: mapping_forward.2
$region0: #{mapping_forward.2}
  #allocation0 [shape = 'u32[]', space=smem, size = 0x4, offset = 0x4, fixed_abs, tag = 'smem constant byte address 0x4 - core index']
  #allocation1 [shape = 'u32[144,128]{1,0:T(1,128)}', space=vmem, size = 0x12000, scoped, tag = 'internal scratch']
  %s0 = inlined_call_operand.vmem [shape: f32[8,4], index: 0, kind: input, shape index: {}]
  %s1 = inlined_call_operand.vmem [shape: f32[2,4,256], index: 1, kind: input, shape index: {}]
  %s2 = inlined_call_operand.vmem [shape: f32[2,8,1], index: 2, kind: output, shape index: {0}]
  %s3 = inlined_call_operand.vmem [shape: f32[2,8,1], index: 3, kind: output, shape index: {1}]
  %4 = xla_tuple %s2, %s3
  %s5 = sld [smem:[#allocation0]]
  $region53: #{mapping_forward.2} parent=0
    _
  %s7 = ssub.s32 1, %s5
  %s8 = scalar_select 0, %s7, %s5
  loop: start=0, step=1, limit=4
  $region2: #{mapping_forward.2} parent=0 // loop_pre_header
    _
  $region3: #{mapping_forward.2} parent=0 // loop_header
    %s10 = sphi 0, %s14
    %p11 = scmp.ge.s32.totalorder %s10, 4
    %s17 = sphi 0, %s29
    %s18 = sphi 0, %s25
    %s19 = sphi 0, %s17
    %s20 = sphi 0, %s18
    %s21 = sphi 0, %s19
    %s22 = sphi 0, %s20
    %s30 = sphi 0, %s30
    %s32 = sphi 0, %s30
    %s33 = sphi 0, %s32
    %s47 = sphi 0, %s33
    %s55 = sphi 0, %s57
    %s58 = sphi 0, %s55
    %s59 = sphi 0, %s58
    %s75 = sphi 0, %s59
    %s81 = sphi 0, %s83
    %s84 = sphi 0, %s81
    %s85 = sphi 0, %s84
    %s101 = sphi 0, %s85
    %s107 = sphi 0, %s109
    %s110 = sphi 0, %s107
    %s111 = sphi 0, %s110
    %s127 = sphi 0, %s111
  $region4: #{mapping_forward.2} parent=0 // loop_header_branch
    %13 = sbr.rel (%p11) target = $region8
  $region5: #{mapping_forward.2} parent=0 // loop_body
    %s15 = ssub.s32 %s10, 1
    %s16 = ssub.s32 %s10, 2
    %s23 = sadd.s32 1, %s18
    %p24 = scmp.ge.s32.totalorder %s23, 1
    %s25 = scalar_select %p24, 0, %s23
    %s26 = sadd.s32 1, %s17
    %s27 = scalar_select %p24, %s26, %s17
    %p28 = scmp.ge.s32.totalorder %s27, 2
    %s29 = scalar_select %p28, 0, %s27
    %s31 = sadd.s32 %s30, 1
    %p34 = scmp.eq.s32.totalorder %s10, 1
    %p35 = scmp.ne.s32.totalorder %s30, %s32
    %p36 = scmp.eq.s32.totalorder %s10, 0
    %p37 = por %p35, %p36
    %p38 = scmp.ne.s32.totalorder %s30, %s32
    %p39 = scmp.eq.s32.totalorder %s15, 1
    %p40 = por %p38, %p39
    %p41 = scmp.ne.s32.totalorder %s32, %s33
    %p42 = scmp.eq.s32.totalorder %s15, 0
    %p43 = por %p41, %p42
    %p44 = scmp.ne.s32.totalorder %s32, %s33
    %p45 = scmp.eq.s32.totalorder %s16, 1
    %p46 = por %p44, %p45
    %p48 = scmp.ne.s32.totalorder %s33, %s47
    %p49 = scmp.eq.s32.totalorder %s16, 0
    %p50 = por %p48, %p49
    %s51 = ssub.s32 %s17, %s29
    %s52 = ssub.s32 %s18, %s25
    %s53 = sor.u32 %s51, %s52
    %p54 = scmp.eq.s32.totalorder %s53, 0
    %s56 = sadd.s32 %s55, 1
    %s57 = scalar_select %p54, %s55, %s56
    %p60 = pneg %p54
    %p61 = scmp.eq.s32.totalorder %s10, 1
    %p62 = por %p60, %p61
    %p63 = scmp.ne.s32.totalorder %s55, %s58
    %p64 = scmp.eq.s32.totalorder %s10, 0
    %p65 = por %p63, %p64
    %p66 = scmp.ne.s32.totalorder %s55, %s58
    %p67 = scmp.eq.s32.totalorder %s15, 1
    %p68 = por %p66, %p67
    %p69 = scmp.ne.s32.totalorder %s58, %s59
    %p70 = scmp.eq.s32.totalorder %s15, 0
    %p71 = por %p69, %p70
    %p72 = scmp.ne.s32.totalorder %s58, %s59
    %p73 = scmp.eq.s32.totalorder %s16, 1
    %p74 = por %p72, %p73
    %p76 = scmp.ne.s32.totalorder %s59, %s75
    %p77 = scmp.eq.s32.totalorder %s16, 0
    %p78 = por %p76, %p77
    %s79 = ssub.s32 %s17, %s29
    %p80 = scmp.eq.s32.totalorder %s79, 0
    %s82 = sadd.s32 %s81, 1
    %s83 = scalar_select %p80, %s81, %s82
    %p86 = pneg %p80
    %p87 = scmp.eq.s32.totalorder %s10, 1
    %p88 = por %p86, %p87
    %p89 = scmp.ne.s32.totalorder %s81, %s84
    %p90 = scmp.eq.s32.totalorder %s10, 0
    %p91 = por %p89, %p90
    %p92 = scmp.ne.s32.totalorder %s81, %s84
    %p93 = scmp.eq.s32.totalorder %s15, 1
    %p94 = por %p92, %p93
    %p95 = scmp.ne.s32.totalorder %s84, %s85
    %p96 = scmp.eq.s32.totalorder %s15, 0
    %p97 = por %p95, %p96
    %p98 = scmp.ne.s32.totalorder %s84, %s85
    %p99 = scmp.eq.s32.totalorder %s16, 1
    %p100 = por %p98, %p99
    %p102 = scmp.ne.s32.totalorder %s85, %s101
    %p103 = scmp.eq.s32.totalorder %s16, 0
    %p104 = por %p102, %p103
    %s105 = ssub.s32 %s17, %s29
    %p106 = scmp.eq.s32.totalorder %s105, 0
    %s108 = sadd.s32 %s107, 1
    %s109 = scalar_select %p106, %s107, %s108
    %p112 = pneg %p106
    %p113 = scmp.eq.s32.totalorder %s10, 1
    %p114 = por %p112, %p113
    %p115 = scmp.ne.s32.totalorder %s107, %s110
    %p116 = scmp.eq.s32.totalorder %s10, 0
    %p117 = por %p115, %p116
    %p118 = scmp.ne.s32.totalorder %s107, %s110
    %p119 = scmp.eq.s32.totalorder %s15, 1
    %p120 = por %p118, %p119
    %p121 = scmp.ne.s32.totalorder %s110, %s111
    %p122 = scmp.eq.s32.totalorder %s15, 0
    %p123 = por %p121, %p122
    %p124 = scmp.ne.s32.totalorder %s110, %s111
    %p125 = scmp.eq.s32.totalorder %s16, 1
    %p126 = por %p124, %p125
    %p128 = scmp.ne.s32.totalorder %s111, %s127
    %p129 = scmp.eq.s32.totalorder %s16, 0
    %p130 = por %p128, %p129
    %p131 = scmp.le.s32.totalorder 1, %s10
    %p132 = scmp.lt.s32.totalorder %s10, 3
    %p133 = pnand %p131, %p132
    %p134 = pneg %p133
    // Predicated region
    $region9: #{mapping_forward.2} parent=5 // pred_check
      _
    $region10: #{mapping_forward.2} parent=5 // pred_check_branch
      %136 = sbr.rel (%p133) target = $region12
    $region11: #{mapping_forward.2} parent=5 // pred_region
      %s137 = ssub.s32 %s10, 1
      // Predicated region
      $region13: #{mapping_forward.2} parent=11 // pred_check
        %p138 = pneg %p43
      $region14: #{mapping_forward.2} parent=11 // pred_check_branch
        %140 = sbr.rel (%p138) target = $region16
      $region15: #{mapping_forward.2} parent=11 // pred_region
        _
      $region16: #{mapping_forward.2} parent=11 // pred_fallthru
        _
    $region12: #{mapping_forward.2} parent=5 // pred_fallthru
      _
    %p141 = scmp.lt.s32.totalorder %s10, 2
    // Predicated region
    $region17: #{mapping_forward.2} parent=5 // pred_check
      %p142 = pneg %p141
    $region18: #{mapping_forward.2} parent=5 // pred_check_branch
      %144 = sbr.rel (%p142) target = $region20
    $region19: #{mapping_forward.2} parent=5 // pred_region
      // Predicated region
      $region21: #{mapping_forward.2} parent=19 // pred_check
        %p145 = pneg %p65
      $region22: #{mapping_forward.2} parent=19 // pred_check_branch
        %147 = sbr.rel (%p145) target = $region24
      $region23: #{mapping_forward.2} parent=19 // pred_region
        %s148 = smul.u32 2, %s18
        %p149 = scmp.lt.s32.totalorder %s17, 1
        %s150 = scalar_select %p149, %s17, 1
        %p151 = scmp.lt.s32.totalorder %s148, 1
        %s152 = scalar_select %p151, %s148, 1
        %s153 = smul.addr %s150, 2
        %s154 = sadd.s32 %s152, %s153
        %s155 = smul.addr %s154, 4
        %s156 = scalar_lea.vmem %s1, %s155
        %s157 = smul.u32 2, %s18
      $region24: #{mapping_forward.2} parent=19 // pred_fallthru
        _
    $region20: #{mapping_forward.2} parent=5 // pred_fallthru
      _
    %p158 = scmp.le.s32.totalorder 1, %s10
    %p159 = scmp.lt.s32.totalorder %s10, 3
    %p160 = pnand %p158, %p159
    %p161 = pneg %p160
    // Predicated region
    $region25: #{mapping_forward.2} parent=5 // pred_check
      _
    $region26: #{mapping_forward.2} parent=5 // pred_check_branch
      %163 = sbr.rel (%p160) target = $region28
    $region27: #{mapping_forward.2} parent=5 // pred_region
      %s164 = ssub.s32 %s10, 1
      %p165 = pneg %p43
      %p166 = pneg %p40
      %s167 = smul.u32 2, %s20
      %p168 = scmp.lt.s32.totalorder %s19, 1
      %s169 = scalar_select %p168, %s19, 1
      %p170 = scmp.lt.s32.totalorder %s167, 1
      %s171 = scalar_select %p170, %s167, 1
      %s172 = smul.addr %s169, 2
      %s173 = sadd.s32 %s171, %s172
      %s174 = smul.addr %s173, 4
      %s175 = scalar_lea.vmem %s1, %s174
      %p176 = pneg %p71
      %p177 = pneg %p68
      %p178 = pneg %p97
      %p179 = pneg %p94
      %p180 = scmp.lt.s32.totalorder %s19, 1
      %s181 = scalar_select %p180, %s19, 1
      %s182 = smul.addr %s181, 8
      %s183 = scalar_lea.vmem %s2, %s182
      %p184 = pneg %p123
      %p185 = pneg %p120
      %p186 = scmp.lt.s32.totalorder %s19, 1
      %s187 = scalar_select %p186, %s19, 1
      %s188 = smul.addr %s187, 8
      %s189 = scalar_lea.vmem %s3, %s188
      %s190 = smul.u32 2, %s20
      %p191 = scmp.lt.s32.totalorder %s19, 1
      %s192 = scalar_select %p191, %s19, 1
      %p193 = scmp.lt.s32.totalorder %s190, 1
      %s194 = scalar_select %p193, %s190, 1
      %s195 = smul.addr %s192, 2
      %s196 = sadd.s32 %s194, %s195
      %s197 = smul.addr %s196, 4
      %s198 = scalar_lea.vmem %s1, %s197
      %s199 = smul.u32 2, %s20
      %p200 = scmp.lt.s32.totalorder %s19, 1
      %s201 = scalar_select %p200, %s19, 1
      %s202 = smul.addr %s201, 8
      %s203 = scalar_lea.vmem %s2, %s202
      %p204 = scmp.lt.s32.totalorder %s19, 1
      %s205 = scalar_select %p204, %s19, 1
      %s206 = smul.addr %s205, 8
      %s207 = scalar_lea.vmem %s3, %s206
      %p208 = scmp.eq.s32.totalorder %s20, 0
      // Predicated region
      $region29: #{mapping_forward.2} parent=27 // pred_check
        %p209 = pneg %p208
      $region30: #{mapping_forward.2} parent=27 // pred_check_branch
        %211 = sbr.rel (%p209) target = $region32
      $region31: #{mapping_forward.2} parent=27 // pred_region
        %vm212 = vcmask 7168
        %213 = vst.msk [vmem:[%s203] sm:$0xff] %vm212, 0.0
        %214 = vst.msk [vmem:[%s207] sm:$0xff] %vm212, 0.0
      $region32: #{mapping_forward.2} parent=27 // pred_fallthru
        _
      %v215 = vld [vmem:[%s198] sm:$0xff]
      %v216 = vld [vmem:[%s0] sm:$0xff]
      %218 = vset.pattern.permute.xlu0 0
      %219 = vperm.xlu0 %218, %v216
      %v220 = vpop.permute.xlu0 %219
      %v223 = vlaneseq
      %v224 = vshrl.u32 %v223, 7
      %v225 = vsub.s32 0, %v224
      %v226 = vrot.slane %v215, %v225
      %v227 = vlaneseq
      %v228 = vshrl.u32 %v227, 7
      %v229 = vsub.s32 4, %v228
      %v230 = vrot.slane %v215, %v229
      %v233 = vlaneseq
      %v234 = vshrl.u32 %v233, 7
      %v235 = vsub.s32 0, %v234
      %v236 = vrot.slane %v226, %v235
      %v237 = vlaneseq
      %v238 = vshrl.u32 %v237, 7
      %v239 = vsub.s32 0, %v238
      %v240 = vrot.slane %v230, %v239
      %v241 = vmul.f32 %v220, %v236
      %v242 = vmul.f32 %v220, %v240
      %243 = vset.pattern.permute.xlu0 1
      %244 = vperm.xlu0 %243, %v216
      %v245 = vpop.permute.xlu0 %244
      %v247 = vlaneseq
      %v248 = vshrl.u32 %v247, 7
      %v249 = vsub.s32 1, %v248
      %v250 = vrot.slane %v215, %v249
      %v251 = vlaneseq
      %v252 = vshrl.u32 %v251, 7
      %v253 = vsub.s32 5, %v252
      %v254 = vrot.slane %v215, %v253
      %v257 = vlaneseq
      %v258 = vshrl.u32 %v257, 7
      %v259 = vsub.s32 1, %v258
      %v260 = vrot.slane %v250, %v259
      %v261 = vlaneseq
      %v262 = vshrl.u32 %v261, 7
      %v263 = vsub.s32 1, %v262
      %v264 = vrot.slane %v254, %v263
      %v265 = vmul.f32 %v245, %v260
      %v266 = vmul.f32 %v245, %v264
      %v267 = vadd.f32 %v241, %v265
      %v268 = vadd.f32 %v242, %v266
      %269 = vset.pattern.permute.xlu0 2
      %270 = vperm.xlu0 %269, %v216
      %v271 = vpop.permute.xlu0 %270
      %v273 = vlaneseq
      %v274 = vshrl.u32 %v273, 7
      %v275 = vsub.s32 2, %v274
      %v276 = vrot.slane %v215, %v275
      %v277 = vlaneseq
      %v278 = vshrl.u32 %v277, 7
      %v279 = vsub.s32 6, %v278
      %v280 = vrot.slane %v215, %v279
      %v283 = vlaneseq
      %v284 = vshrl.u32 %v283, 7
      %v285 = vsub.s32 2, %v284
      %v286 = vrot.slane %v276, %v285
      %v287 = vlaneseq
      %v288 = vshrl.u32 %v287, 7
      %v289 = vsub.s32 2, %v288
      %v290 = vrot.slane %v280, %v289
      %v291 = vmul.f32 %v271, %v286
      %v292 = vmul.f32 %v271, %v290
      %v293 = vadd.f32 %v267, %v291
      %v294 = vadd.f32 %v268, %v292
      %295 = vset.pattern.permute.xlu0 3
      %296 = vperm.xlu0 %295, %v216
      %v297 = vpop.permute.xlu0 %296
      %v299 = vlaneseq
      %v300 = vshrl.u32 %v299, 7
      %v301 = vsub.s32 3, %v300
      %v302 = vrot.slane %v215, %v301
      %v303 = vlaneseq
      %v304 = vshrl.u32 %v303, 7
      %v305 = vsub.s32 7, %v304
      %v306 = vrot.slane %v215, %v305
      %v309 = vlaneseq
      %v310 = vshrl.u32 %v309, 7
      %v311 = vsub.s32 3, %v310
      %v312 = vrot.slane %v302, %v311
      %v313 = vlaneseq
      %v314 = vshrl.u32 %v313, 7
      %v315 = vsub.s32 3, %v314
      %v316 = vrot.slane %v306, %v315
      %v317 = vmul.f32 %v297, %v312
      %v318 = vmul.f32 %v297, %v316
      %v319 = vadd.f32 %v293, %v317
      %v320 = vadd.f32 %v294, %v318
      %v321 = vld [vmem:[%s203] sm:$0xff]
      %v322 = vadd.f32 %v319, %v320
      %323 = vadd.xlane.f32.xlu0 %v322
      %v324 = vpop.xlane.xlu0 %323
      %v325 = vadd.f32 %v321, %v324
      %vm326 = vcmask 7168
      %327 = vst.msk [vmem:[%s203] sm:$0xff] %vm326, %v325
      %v328 = vld [vmem:[%s207] sm:$0xff]
      %v329 = vmul.f32 %v319, %v319
      %v330 = vmul.f32 %v320, %v320
      %v331 = vadd.f32 %v329, %v330
      %332 = vadd.xlane.f32.xlu0 %v331
      %v333 = vpop.xlane.xlu0 %332
      %v334 = vadd.f32 %v328, %v333
      %335 = vst.msk [vmem:[%s207] sm:$0xff] %vm326, %v334
      %p336 = scmp.lt.s32.totalorder %s19, 1
      %s337 = scalar_select %p336, %s19, 1
      %s338 = smul.addr %s337, 8
      %s339 = scalar_lea.vmem %s2, %s338
      %p340 = scmp.lt.s32.totalorder %s19, 1
      %s341 = scalar_select %p340, %s19, 1
      %s342 = smul.addr %s341, 8
      %s343 = scalar_lea.vmem %s3, %s342
      // Predicated region
      $region33: #{mapping_forward.2} parent=27 // pred_check
        %p344 = pneg %p94
      $region34: #{mapping_forward.2} parent=27 // pred_check_branch
        %346 = sbr.rel (%p344) target = $region36
      $region35: #{mapping_forward.2} parent=27 // pred_region
        _
      $region36: #{mapping_forward.2} parent=27 // pred_fallthru
        _
      // Predicated region
      $region37: #{mapping_forward.2} parent=27 // pred_check
        %p347 = pneg %p120
      $region38: #{mapping_forward.2} parent=27 // pred_check_branch
        %349 = sbr.rel (%p347) target = $region40
      $region39: #{mapping_forward.2} parent=27 // pred_region
        _
      $region40: #{mapping_forward.2} parent=27 // pred_fallthru
        _
    $region28: #{mapping_forward.2} parent=5 // pred_fallthru
      _
    %p350 = scmp.le.s32.totalorder 2, %s10
    // Predicated region
    $region41: #{mapping_forward.2} parent=5 // pred_check
      %p351 = pneg %p350
    $region42: #{mapping_forward.2} parent=5 // pred_check_branch
      %353 = sbr.rel (%p351) target = $region44
    $region43: #{mapping_forward.2} parent=5 // pred_region
      %s354 = ssub.s32 %s10, 2
      // Predicated region
      $region45: #{mapping_forward.2} parent=43 // pred_check
        %p355 = pneg %p100
      $region46: #{mapping_forward.2} parent=43 // pred_check_branch
        %357 = sbr.rel (%p355) target = $region48
      $region47: #{mapping_forward.2} parent=43 // pred_region
        %p358 = scmp.lt.s32.totalorder %s21, 1
        %s359 = scalar_select %p358, %s21, 1
        %s360 = smul.addr %s359, 8
        %s361 = scalar_lea.vmem %s2, %s360
      $region48: #{mapping_forward.2} parent=43 // pred_fallthru
        _
      // Predicated region
      $region49: #{mapping_forward.2} parent=43 // pred_check
        %p362 = pneg %p126
      $region50: #{mapping_forward.2} parent=43 // pred_check_branch
        %364 = sbr.rel (%p362) target = $region52
      $region51: #{mapping_forward.2} parent=43 // pred_region
        %p365 = scmp.lt.s32.totalorder %s21, 1
        %s366 = scalar_select %p365, %s21, 1
        %s367 = smul.addr %s366, 8
        %s368 = scalar_lea.vmem %s3, %s367
      $region52: #{mapping_forward.2} parent=43 // pred_fallthru
        _
    $region44: #{mapping_forward.2} parent=5 // pred_fallthru
      _
  $region6: #{mapping_forward.2} parent=0 // loop_footer
    %s14 = sadd.s32 1, %s10
  $region7: #{mapping_forward.2} parent=0 // loop_footer_branch
    %9 = sbr.rel target = $region3
  $region8: #{mapping_forward.2} parent=0 // loop_exit
    _

</llo_original>
